<compile_context>
chip_gen: v7x
topology: tpu7x:2x2x1
jax: 0.10.0
libtpu: 0.0.40
codegen_flags: <defaults>
</compile_context>

<pallas_src>
import jax
import jax.numpy as jnp
from jax.experimental import pallas as pl
from jax.experimental.pallas import tpu as pltpu


def _round_up(x, m):
    return ((x + m - 1) // m) * m


def _nan_to_num(x, posinf_val):
    """torch.nan_to_num(x, posinf=posinf_val): nan->0, +inf->posinf_val, -inf->dtype min."""
    neginf_val = jnp.finfo(x.dtype).min
    x = jnp.where(jnp.isnan(x), jnp.zeros_like(x), x)
    x = jnp.where(x == jnp.inf, jnp.full_like(x, posinf_val), x)
    x = jnp.where(x == -jnp.inf, jnp.full_like(x, neginf_val), x)
    return x


def _fused_init_embed_kernel(x_ref, w_ref, o_ref):
    # x_ref: (TILE_ROWS, F)  fused feature rows, already sanitized and in the
    #                        final [global; customers] output row order
    # w_ref: (F, D)          stacked [Wg^T; Wc^T; zero pad]
    # o_ref: (TILE_ROWS, D)
    o_ref[...] = jnp.dot(
        x_ref[...],
        w_ref[...],
        preferred_element_type=jnp.float32,
        precision=jax.lax.Precision.HIGHEST,
    ).astype(o_ref.dtype)


def _choose_row_tile(total_rows, target_rows):
    """Sublane(8)-aligned row tile for the flat (rows, F) problem.

    Rows are fully independent (each output row is just row @ Wcat), so tiles
    do not need to align to batch boundaries.
    """
    rows8 = _round_up(max(total_rows, 1), 8)
    if rows8 <= 8:
        return rows8
    if rows8 <= target_rows:
        # Small problem: split into >=2 grid steps so a second TensorCore
        # (v7x megacore) gets work.  Still 8-aligned.
        return _round_up(-(-rows8 // 2), 8)
    return target_rows


def mtvrp_init_embedding(
    global_feats,
    cust_feats,
    wg,
    wc,
    *,
    posinf_val=0.0,
    out_dtype=jnp.float32,
    tile_rows=8192,  # can be raised to 16384 on v7x to shave per-step overhead
):
    """Pallas implementation of MTVRPInitEmbeddingRouteFinderBase.forward.

    Args:
      global_feats: [B, 1, Fg] float32  (output of _global_feats)
      cust_feats:   [B, N, Fc] float32  (output of _cust_feats)
      wg: [D, Fg]  nn.Linear weight (project_global_feats, bias=False)
      wc: [D, Fc]  nn.Linear weight (project_customers_feats, bias=False)
    Returns:
      [B, 1+N, D] == concat([global_emb, cust_emb], axis=-2)
    """
    B, one, Fg = global_feats.shape
    assert one == 1
    Bc, N, Fc = cust_feats.shape
    assert Bc == B
    D = wg.shape[0]
    assert wc.shape[0] == D and wg.shape[1] == Fg and wc.shape[1] == Fc

    dtype = jnp.float32
    R = 1 + N                        # output rows per batch
    Fsum = Fg + Fc
    F = _round_up(Fsum, 8)           # fused K, padded to sublane granularity

    # Fused weight: rows [0, Fg) = Wg^T, rows [Fg, Fsum) = Wc^T, rest zero.
    wcat = jnp.concatenate([wg.T, wc.T], axis=0).astype(dtype)   # (Fsum, D)
    wcat = jnp.pad(wcat, ((0, F - Fsum), (0, 0)))                # (F, D)

    # nan_to_num is fused here into the pad/concat pass that already touches
    # every feature element; the kernel stays purely DMA/MXU/store-bound.
    g = _nan_to_num(global_feats.astype(dtype), float(posinf_val))
    c = _nan_to_num(cust_feats.astype(dtype), float(posinf_val))

    # Per batch: row 0 -> global feats in cols [0, Fg); rows 1..N -> customer
    # feats in cols [Fg, Fsum); zeros elsewhere.  Rows are already in the
    # final [global; customers] order, flattened across batches.
    g_pad = jnp.pad(g, ((0, 0), (0, 0), (0, F - Fg)))
    c_pad = jnp.pad(c, ((0, 0), (0, 0), (Fg, F - Fsum)))
    feats = jnp.concatenate([g_pad, c_pad], axis=1).reshape(B * R, F)

    total_rows = B * R
    tile = _choose_row_tile(total_rows, tile_rows)
    rows_padded = _round_up(total_rows, tile)
    if rows_padded != total_rows:
        # Pad to a whole number of tiles: every block (load and store) is
        # full-extent and unmasked; padded rows are zeros and dropped below.
        feats = jnp.pad(feats, ((0, rows_padded - total_rows), (0, 0)))
    grid = (rows_padded // tile,)

    # VMEM per step (double-buffered): LHS block lane-pads F -> 128 lanes
    # (~512 B/row) and the output block is D*4 = 512 B/row, so at tile=8192
    # the footprint is ~16 MiB.  40 MiB scoped limit gives headroom on
    # v5e/v6e and stays well under v7x's 64 MiB physical VMEM.
    out_flat = pl.pallas_call(
        _fused_init_embed_kernel,
        out_shape=jax.ShapeDtypeStruct((rows_padded, D), out_dtype),
        grid_spec=pltpu.PrefetchScalarGridSpec(
            num_scalar_prefetch=0,
            grid=grid,
            in_specs=[
                pl.BlockSpec((tile, F), lambda r: (r, 0)),
                pl.BlockSpec((F, D), lambda r: (0, 0)),
            ],
            out_specs=pl.BlockSpec((tile, D), lambda r: (r, 0)),
        ),
        compiler_params=pltpu.CompilerParams(
            dimension_semantics=("parallel",),
            vmem_limit_bytes=40 * 1024 * 1024,
        ),
    )(feats, wcat)

    return out_flat[:total_rows].reshape(B, R, D)


def reference(global_feats, cust_feats, wg, wc, posinf_val=0.0):
    g = _nan_to_num(global_feats, posinf_val)
    c = _nan_to_num(cust_feats, posinf_val)
    ge = jnp.einsum("bsf,df->bsd", g, wg, precision=jax.lax.Precision.HIGHEST)
    ce = jnp.einsum("bsf,df->bsd", c, wc, precision=jax.lax.Precision.HIGHEST)
    return jnp.concatenate([ge, ce], axis=-2)


if __name__ == "__main__":
    # Small deterministic example consistent with the module:
    # num_global_feats=7, num_cust_feats=5, embed_dim=128.
    B, N, Fg, Fc, D = 2, 8, 7, 5, 128
    posinf_val = 0.0

    key = jax.random.PRNGKey(0)
    kg, kc, kwg, kwc = jax.random.split(key, 4)

    global_feats = jax.random.normal(kg, (B, 1, Fg), dtype=jnp.float32)
    cust_feats = jax.random.normal(kc, (B, N, Fc), dtype=jnp.float32)

    # Inject some inf / nan values to exercise nan_to_num semantics.
    global_feats = global_feats.at[0, 0, 1].set(jnp.inf)
    cust_feats = cust_feats.at[1, 3, 2].set(jnp.inf)
    cust_feats = cust_feats.at[0, 5, 4].set(jnp.nan)

    # Deterministic nn.Linear-style weights (uniform in +-1/sqrt(fan_in)).
    wg = jax.random.uniform(kwg, (D, Fg), jnp.float32, -1.0, 1.0) / jnp.sqrt(Fg)
    wc = jax.random.uniform(kwc, (D, Fc), jnp.float32, -1.0, 1.0) / jnp.sqrt(Fc)

    out = mtvrp_init_embedding(
        global_feats, cust_feats, wg, wc, posinf_val=posinf_val
    )
    out = jax.block_until_ready(out)

    ref = reference(global_feats, cust_feats, wg, wc, posinf_val)
    assert out.shape == (B, 1 + N, D), out.shape
    assert jnp.allclose(out, ref, atol=1e-5, rtol=1e-5), float(
        jnp.max(jnp.abs(out - ref))
    )

    print("KERNEL_OK")
</pallas_src>

<mosaic_0001>
module attributes {stable_mosaic.version = 11 : i64} {
  func.func @_fused_init_embed_kernel(%arg0: i32, %arg1: memref<16x16xf32, #tpu.memory_space<vmem>>, %arg2: memref<16x128xf32, #tpu.memory_space<vmem>>, %arg3: memref<16x128xf32, #tpu.memory_space<vmem>>) attributes {dimension_semantics = [#tpu.dimension_semantics<parallel>], iteration_bounds = array<i64: 2>, scalar_prefetch = 0 : i64, scratch_operands = 0 : i64, tpu.core_type = #tpu.core_type<tc>, window_params = [{transform_indices = @transform_0, window_bounds = array<i64: 16, 16>}, {pipeline_mode = #tpu.pipeline_mode<synchronous>, transform_indices = @transform_1, window_bounds = array<i64: 16, 128>}, {transform_indices = @transform_2, window_bounds = array<i64: 16, 128>}]} {
    %c0 = arith.constant 0 : index
    %c0_0 = arith.constant 0 : index
    %0 = vector.load %arg1[%c0, %c0_0] : memref<16x16xf32, #tpu.memory_space<vmem>>, vector<16x16xf32>
    %c0_1 = arith.constant 0 : index
    %c0_2 = arith.constant 0 : index
    %1 = vector.load %arg2[%c0_1, %c0_2] : memref<16x128xf32, #tpu.memory_space<vmem>>, vector<16x128xf32>
    %cst = arith.constant dense<0.000000e+00> : vector<16x128xf32>
    %2 = tpu.matmul %0, %1, %cst {dimension_numbers = #tpu.dot_dimension_numbers<[1], [0], [0], [1], [0, 0, 1, 1], [], []>, precision = #tpu.contract_precision<fp32>} : vector<16x16xf32>, vector<16x128xf32>, vector<16x128xf32> -> vector<16x128xf32>
    %c0_3 = arith.constant 0 : index
    %c0_4 = arith.constant 0 : index
    %3 = vector.load %arg3[%c0_3, %c0_4] : memref<16x128xf32, #tpu.memory_space<vmem>>, vector<16x128xf32>
    tpu.vector_store %arg3[%c0_3, %c0_4], %2 {strides = array<i32>} : memref<16x128xf32, #tpu.memory_space<vmem>>, vector<16x128xf32>,
    return
  }
  func.func @transform_0(%arg0: i32) -> (i32, i32) {
    %c0_i32 = arith.constant 0 : i32
    %c0_i32_0 = arith.constant 0 : i32
    return %arg0, %c0_i32 : i32, i32
  }
  func.func @transform_1(%arg0: i32) -> (i32, i32) {
    %c0_i32 = arith.constant 0 : i32
    %c0_i32_0 = arith.constant 0 : i32
    %c0_i32_1 = arith.constant 0 : i32
    return %c0_i32, %c0_i32_0 : i32, i32
  }
  func.func @transform_2(%arg0: i32) -> (i32, i32) {
    %c0_i32 = arith.constant 0 : i32
    %c0_i32_0 = arith.constant 0 : i32
    return %arg0, %c0_i32 : i32, i32
  }
}

</mosaic_0001>

<llo_original>
// kernel: tpu_custom_call.1
$region0: #{tpu_custom_call.1}
  #allocation0 [shape = 'u32[]', space=smem, size = 0x4, offset = 0x4, fixed_abs, tag = 'smem constant byte address 0x4 - core index']
  #allocation1 [shape = 'u32[144,128]{1,0:T(1,128)}', space=vmem, size = 0x12000, scoped, tag = 'internal scratch']
  %s0 = inlined_call_operand.vmem [shape: f32[32,16], index: 0, kind: input, shape index: {}]
  %s1 = inlined_call_operand.vmem [shape: f32[16,128], index: 1, kind: input, shape index: {}]
  %s2 = inlined_call_operand.hbm [shape: f32[32,128], index: 2, kind: output, shape index: {}]
  %s3 = sld [smem:[#allocation0]]
  $region41: #{tpu_custom_call.1} parent=0
    _
  %s5 = ssub.s32 1, %s3
  %s6 = scalar_select 0, %s5, %s3
  $region1: #{tpu_custom_call.1} parent=0
    #allocation2 [shape = 'u8[16384]{0}', space=vmem, size = 0x4000, scoped, tag = 'output window, operand 0']
    #allocation3 [shape = 's32[2]{0}', space=sflag, size = 0x8, scoped, tag = 'scoped memory for tpu_custom_call.1']
    %7 = vsyncpa [#allocation3], 0
    %s8 = scalar_lea.sflag [#allocation3], 1
    %9 = vsyncpa %s8, 0
    loop: start=0, step=1, limit=4
    $region2: #{tpu_custom_call.1} parent=1 // loop_pre_header
      _
    $region3: #{tpu_custom_call.1} parent=1 // loop_header
      %s11 = sphi 0, %s15
      %p12 = scmp.ge.s32.totalorder %s11, 4
      %s21 = sphi 0, %s23
      %s24 = sphi 0, %s21
      %s25 = sphi 0, %s24
      %s41 = sphi 0, %s25
      %s45 = sphi 0, %s45
      %s47 = sphi 0, %s45
      %s48 = sphi 0, %s47
      %s62 = sphi 0, %s48
      %s68 = sphi 0, %s70
      %s71 = sphi 0, %s68
      %s72 = sphi 0, %s71
      %s88 = sphi 0, %s72
    $region4: #{tpu_custom_call.1} parent=1 // loop_header_branch
      %14 = sbr.rel (%p12) target = $region8
    $region5: #{tpu_custom_call.1} parent=1 // loop_body
      %s16 = ssub.s32 %s11, 1
      %s17 = ssub.s32 %s11, 2
      %s18 = sadd.s32 %s11, 1
      %s19 = ssub.s32 %s11, %s18
      %p20 = scmp.eq.s32.totalorder %s19, 0
      %s22 = sadd.s32 %s21, 1
      %s23 = scalar_select %p20, %s21, %s22
      %p26 = pneg %p20
      %p27 = scmp.eq.s32.totalorder %s11, 1
      %p28 = por %p26, %p27
      %p29 = scmp.ne.s32.totalorder %s21, %s24
      %p30 = scmp.eq.s32.totalorder %s11, 0
      %p31 = por %p29, %p30
      %p32 = scmp.ne.s32.totalorder %s21, %s24
      %p33 = scmp.eq.s32.totalorder %s16, 1
      %p34 = por %p32, %p33
      %p35 = scmp.ne.s32.totalorder %s24, %s25
      %p36 = scmp.eq.s32.totalorder %s16, 0
      %p37 = por %p35, %p36
      %p38 = scmp.ne.s32.totalorder %s24, %s25
      %p39 = scmp.eq.s32.totalorder %s17, 1
      %p40 = por %p38, %p39
      %p42 = scmp.ne.s32.totalorder %s25, %s41
      %p43 = scmp.eq.s32.totalorder %s17, 0
      %p44 = por %p42, %p43
      %s46 = sadd.s32 %s45, 1
      %p49 = scmp.eq.s32.totalorder %s11, 1
      %p50 = scmp.ne.s32.totalorder %s45, %s47
      %p51 = scmp.eq.s32.totalorder %s11, 0
      %p52 = por %p50, %p51
      %p53 = scmp.ne.s32.totalorder %s45, %s47
      %p54 = scmp.eq.s32.totalorder %s16, 1
      %p55 = por %p53, %p54
      %p56 = scmp.ne.s32.totalorder %s47, %s48
      %p57 = scmp.eq.s32.totalorder %s16, 0
      %p58 = por %p56, %p57
      %p59 = scmp.ne.s32.totalorder %s47, %s48
      %p60 = scmp.eq.s32.totalorder %s17, 1
      %p61 = por %p59, %p60
      %p63 = scmp.ne.s32.totalorder %s48, %s62
      %p64 = scmp.eq.s32.totalorder %s17, 0
      %p65 = por %p63, %p64
      %s66 = ssub.s32 %s11, %s18
      %p67 = scmp.eq.s32.totalorder %s66, 0
      %s69 = sadd.s32 %s68, 1
      %s70 = scalar_select %p67, %s68, %s69
      %p73 = pneg %p67
      %p74 = scmp.eq.s32.totalorder %s11, 1
      %p75 = por %p73, %p74
      %p76 = scmp.ne.s32.totalorder %s68, %s71
      %p77 = scmp.eq.s32.totalorder %s11, 0
      %p78 = por %p76, %p77
      %p79 = scmp.ne.s32.totalorder %s68, %s71
      %p80 = scmp.eq.s32.totalorder %s16, 1
      %p81 = por %p79, %p80
      %p82 = scmp.ne.s32.totalorder %s71, %s72
      %p83 = scmp.eq.s32.totalorder %s16, 0
      %p84 = por %p82, %p83
      %p85 = scmp.ne.s32.totalorder %s71, %s72
      %p86 = scmp.eq.s32.totalorder %s17, 1
      %p87 = por %p85, %p86
      %p89 = scmp.ne.s32.totalorder %s72, %s88
      %p90 = scmp.eq.s32.totalorder %s17, 0
      %p91 = por %p89, %p90
      %p92 = scmp.le.s32.totalorder 1, %s11
      %p93 = scmp.lt.s32.totalorder %s11, 3
      %p94 = pnand %p92, %p93
      %p95 = pneg %p94
      // Predicated region
      $region9: #{tpu_custom_call.1} parent=5 // pred_check
        _
      $region10: #{tpu_custom_call.1} parent=5 // pred_check_branch
        %97 = sbr.rel (%p94) target = $region12
      $region11: #{tpu_custom_call.1} parent=5 // pred_region
        %s98 = ssub.s32 %s11, 1
        // Predicated region
        $region13: #{tpu_custom_call.1} parent=11 // pred_check
          %p99 = pneg %p58
        $region14: #{tpu_custom_call.1} parent=11 // pred_check_branch
          %101 = sbr.rel (%p99) target = $region16
        $region15: #{tpu_custom_call.1} parent=11 // pred_region
          _
        $region16: #{tpu_custom_call.1} parent=11 // pred_fallthru
          _
      $region12: #{tpu_custom_call.1} parent=5 // pred_fallthru
        _
      %p102 = scmp.lt.s32.totalorder %s11, 2
      // Predicated region
      $region17: #{tpu_custom_call.1} parent=5 // pred_check
        %p103 = pneg %p102
      $region18: #{tpu_custom_call.1} parent=5 // pred_check_branch
        %105 = sbr.rel (%p103) target = $region20
      $region19: #{tpu_custom_call.1} parent=5 // pred_region
        // Predicated region
        $region21: #{tpu_custom_call.1} parent=19 // pred_check
          %p106 = pneg %p31
        $region22: #{tpu_custom_call.1} parent=19 // pred_check_branch
          %108 = sbr.rel (%p106) target = $region24
        $region23: #{tpu_custom_call.1} parent=19 // pred_region
          %s109 = smul.u32 2, %s11
          %p110 = scmp.lt.s32.totalorder %s109, 3
          %s111 = scalar_select %p110, %s109, 3
          %s112 = smul.addr %s111, 8
          %s113 = scalar_lea.vmem %s0, %s112
          %s114 = smul.u32 2, %s11
        $region24: #{tpu_custom_call.1} parent=19 // pred_fallthru
          _
      $region20: #{tpu_custom_call.1} parent=5 // pred_fallthru
        _
      %p115 = scmp.le.s32.totalorder 1, %s11
      %p116 = scmp.lt.s32.totalorder %s11, 3
      %p117 = pnand %p115, %p116
      %p118 = pneg %p117
      // Predicated region
      $region25: #{tpu_custom_call.1} parent=5 // pred_check
        _
      $region26: #{tpu_custom_call.1} parent=5 // pred_check_branch
        %120 = sbr.rel (%p117) target = $region28
      $region27: #{tpu_custom_call.1} parent=5 // pred_region
        %s121 = ssub.s32 %s11, 1
        %s122 = smul.u32 2, %s16
        %p123 = scmp.lt.s32.totalorder %s122, 3
        %s124 = scalar_select %p123, %s122, 3
        %s125 = smul.addr %s124, 8
        %s126 = scalar_lea.vmem %s0, %s125
        %p127 = pneg %p37
        %p128 = pneg %p34
        %p129 = pneg %p58
        %p130 = pneg %p55
        %p131 = pneg %p84
        %p132 = pneg %p81
        %s133 = sand.u32 %s71, 1
        %s134 = scalar_lea.sflag [#allocation3], %s133
        %s135 = sand.u32 %s71, 1
        %s136 = smul.addr %s135, 16
        %s137 = scalar_lea.vmem [#allocation2], %s136
        %s138 = smul.u32 2, %s16
        %p139 = scmp.lt.s32.totalorder %s138, 3
        %s140 = scalar_select %p139, %s138, 3
        %s141 = smul.addr %s140, 8
        %s142 = scalar_lea.vmem %s0, %s141
        %s143 = smul.u32 2, %s16
        %s144 = smul.u32 2, %s16
        %v145 = vld [vmem:[%s142] sm:$0xff]
        %v146 = vld [vmem:[%s142 + $0x8] sm:$0xff]
        %v147 = vld [vmem:[%s1] sm:$0xff]
        %v148 = vld [vmem:[%s1 + $0x8] sm:$0xff]
        %vm149 = vcmask 130048
        %v151 = vsel %vm149, %v145, 0
        %v154 = vsel %vm149, %v146, 0
        %156 = vmatprep.subr.mxu0 0.0
        %v157 = vand.u32 %v147, 4294901760
        %158 = vmatpush1.msra.mxu0 %v157
        %159 = vmatprep.subr.mxu0 0.0
        %v160 = vand.u32 %v148, 4294901760
        %161 = vmatpush1.msra.mxu0 %v160
        %162 = vmatprep.subr.mxu0 0.0
        %163 = vmatpush1.msra.mxu0 0.0
        %164 = vmatprep.subr.mxu0 0.0
        %165 = vmatpush1.msra.mxu0 0.0
        %166 = vmatprep.subr.mxu0 0.0
        %167 = vmatpush1.msra.mxu0 0.0
        %168 = vmatprep.subr.mxu0 0.0
        %169 = vmatpush1.msra.mxu0 0.0
        %170 = vmatprep.subr.mxu0 0.0
        %171 = vmatpush1.msra.mxu0 0.0
        %172 = vmatprep.subr.mxu0 0.0
        %173 = vmatpush1.msra.mxu0 0.0
        %174 = vmatprep.subr.mxu0 0.0
        %175 = vmatpush1.msra.mxu0 0.0
        %176 = vmatprep.subr.mxu0 0.0
        %177 = vmatpush1.msra.mxu0 0.0
        %178 = vmatprep.subr.mxu0 0.0
        %179 = vmatpush1.msra.mxu0 0.0
        %180 = vmatprep.subr.mxu0 0.0
        %181 = vmatpush1.msra.mxu0 0.0
        %182 = vmatprep.subr.mxu0 0.0
        %183 = vmatpush1.msra.mxu0 0.0
        %184 = vmatprep.subr.mxu0 0.0
        %185 = vmatpush1.msra.mxu0 0.0
        %186 = vmatprep.subr.mxu0 0.0
        %187 = vmatpush1.msra.mxu0 0.0
        %188 = vmatprep.subr.mxu0 0.0
        %189 = vmatpush1.msra.mxu0 0.0
        %190 = vmatprep.subr.mxu0 0.0
        %191 = vmatpush1.msra.mxu0 0.0
        %192 = vmatprep.subr.mxu0 0.0
        %193 = vmatpush1.msra.mxu0 0.0
        %194 = vmatprep.subr.mxu0 0.0
        %195 = vmatpush1.msra.mxu0 0.0
        %196 = vmatprep.subr.mxu0 0.0
        %197 = vmatpush1.msra.mxu0 0.0
        %198 = vmatprep.subr.mxu0 0.0
        %199 = vmatpush1.msra.mxu0 0.0
        %200 = vmatprep.subr.mxu0 0.0
        %201 = vmatpush1.msra.mxu0 0.0
        %202 = vmatprep.subr.mxu0 0.0
        %203 = vmatpush1.msra.mxu0 0.0
        %204 = vmatprep.subr.mxu0 0.0
        %205 = vmatpush1.msra.mxu0 0.0
        %206 = vmatprep.subr.mxu0 0.0
        %207 = vmatpush1.msra.mxu0 0.0
        %208 = vmatprep.subr.mxu0 0.0
        %209 = vmatpush1.msra.mxu0 0.0
        %210 = vmatprep.subr.mxu0 0.0
        %211 = vmatpush1.msra.mxu0 0.0
        %212 = vmatprep.subr.mxu0 0.0
        %213 = vmatpush1.msra.mxu0 0.0
        %214 = vmatprep.subr.mxu0 0.0
        %215 = vmatpush1.msra.mxu0 0.0
        %216 = vmatprep.subr.mxu0 0.0
        %217 = vmatpush1.msra.mxu0 0.0
        %218 = vmatprep.subr.mxu0 0.0
        %219 = vmatpush1.msra.mxu0 0.0
        %220 = vmatprep.subr.mxu0 0.0
        %221 = vmatpush1.msra.mxu0 0.0
        %222 = vmatprep.mubr.f32.mxu0 0.0
        %v223 = vand.u32 %v151, 4294901760
        %v224 = vsub.f32 %v151, %v223
        %v225 = vand.u32 %v224, 4294901760
        %v226 = vsub.f32 %v224, %v225
        %v227 = vand.u32 %v226, 4294901760
        %228 = vmatmul.mubr.f32.gmra.mrb[0].mxu0 %v227
        %v229 = vpop.f32.mrb[0].mxu0
        %v230 = vadd.f32 0.0, %v229
        %v231 = vpop.f32.mrb[0].mxu0
        %232 = vmatprep.mubr.f32.mxu0 0.0
        %v233 = vand.u32 %v154, 4294901760
        %v234 = vsub.f32 %v154, %v233
        %v235 = vand.u32 %v234, 4294901760
        %v236 = vsub.f32 %v234, %v235
        %v237 = vand.u32 %v236, 4294901760
        %238 = vmatmul.mubr.f32.gmra.mrb[0].mxu0 %v237
        %v239 = vpop.f32.mrb[0].mxu0
        %v240 = vadd.f32 0.0, %v239
        %v241 = vpop.f32.mrb[0].mxu0
        %242 = vdwg.mxu0
        %243 = vmatprep.subr.mxu0 0.0
        %v244 = vand.u32 %v147, 4294901760
        %v245 = vsub.f32 %v147, %v244
        %v246 = vand.u32 %v245, 4294901760
        %v247 = vsub.f32 %v245, %v246
        %v248 = vand.u32 %v247, 4294901760
        %249 = vmatpush1.msra.mxu0 %v248
        %250 = vmatprep.subr.mxu0 0.0
        %v251 = vand.u32 %v148, 4294901760
        %v252 = vsub.f32 %v148, %v251
        %v253 = vand.u32 %v252, 4294901760
        %v254 = vsub.f32 %v252, %v253
        %v255 = vand.u32 %v254, 4294901760
        %256 = vmatpush1.msra.mxu0 %v255
        %257 = vmatprep.subr.mxu0 0.0
        %258 = vmatpush1.msra.mxu0 0.0
        %259 = vmatprep.subr.mxu0 0.0
        %260 = vmatpush1.msra.mxu0 0.0
        %261 = vmatprep.subr.mxu0 0.0
        %262 = vmatpush1.msra.mxu0 0.0
        %263 = vmatprep.subr.mxu0 0.0
        %264 = vmatpush1.msra.mxu0 0.0
        %265 = vmatprep.subr.mxu0 0.0
        %266 = vmatpush1.msra.mxu0 0.0
        %267 = vmatprep.subr.mxu0 0.0
        %268 = vmatpush1.msra.mxu0 0.0
        %269 = vmatprep.subr.mxu0 0.0
        %270 = vmatpush1.msra.mxu0 0.0
        %271 = vmatprep.subr.mxu0 0.0
        %272 = vmatpush1.msra.mxu0 0.0
        %273 = vmatprep.subr.mxu0 0.0
        %274 = vmatpush1.msra.mxu0 0.0
        %275 = vmatprep.subr.mxu0 0.0
        %276 = vmatpush1.msra.mxu0 0.0
        %277 = vmatprep.subr.mxu0 0.0
        %278 = vmatpush1.msra.mxu0 0.0
        %279 = vmatprep.subr.mxu0 0.0
        %280 = vmatpush1.msra.mxu0 0.0
        %281 = vmatprep.subr.mxu0 0.0
        %282 = vmatpush1.msra.mxu0 0.0
        %283 = vmatprep.subr.mxu0 0.0
        %284 = vmatpush1.msra.mxu0 0.0
        %285 = vmatprep.subr.mxu0 0.0
        %286 = vmatpush1.msra.mxu0 0.0
        %287 = vmatprep.subr.mxu0 0.0
        %288 = vmatpush1.msra.mxu0 0.0
        %289 = vmatprep.subr.mxu0 0.0
        %290 = vmatpush1.msra.mxu0 0.0
        %291 = vmatprep.subr.mxu0 0.0
        %292 = vmatpush1.msra.mxu0 0.0
        %293 = vmatprep.subr.mxu0 0.0
        %294 = vmatpush1.msra.mxu0 0.0
        %295 = vmatprep.subr.mxu0 0.0
        %296 = vmatpush1.msra.mxu0 0.0
        %297 = vmatprep.subr.mxu0 0.0
        %298 = vmatpush1.msra.mxu0 0.0
        %299 = vmatprep.subr.mxu0 0.0
        %300 = vmatpush1.msra.mxu0 0.0
        %301 = vmatprep.subr.mxu0 0.0
        %302 = vmatpush1.msra.mxu0 0.0
        %303 = vmatprep.subr.mxu0 0.0
        %304 = vmatpush1.msra.mxu0 0.0
        %305 = vmatprep.subr.mxu0 0.0
        %306 = vmatpush1.msra.mxu0 0.0
        %307 = vmatprep.subr.mxu0 0.0
        %308 = vmatpush1.msra.mxu0 0.0
        %309 = vmatprep.subr.mxu0 0.0
        %310 = vmatpush1.msra.mxu0 0.0
        %311 = vmatprep.subr.mxu0 0.0
        %312 = vmatpush1.msra.mxu0 0.0
        %313 = vmatprep.subr.mxu0 0.0
        %314 = vmatpush1.msra.mxu0 0.0
        %315 = vmatprep.subr.mxu0 0.0
        %316 = vmatpush1.msra.mxu0 0.0
        %317 = vmatprep.mubr.f32.mxu0 0.0
        %v318 = vand.u32 %v151, 4294901760
        %319 = vmatmul.mubr.f32.gmra.mrb[0].mxu0 %v318
        %v320 = vpop.f32.mrb[0].mxu0
        %v321 = vadd.f32 %v230, %v320
        %v322 = vpop.f32.mrb[0].mxu0
        %323 = vmatprep.mubr.f32.mxu0 0.0
        %v324 = vand.u32 %v154, 4294901760
        %325 = vmatmul.mubr.f32.gmra.mrb[0].mxu0 %v324
        %v326 = vpop.f32.mrb[0].mxu0
        %v327 = vadd.f32 %v240, %v326
        %v328 = vpop.f32.mrb[0].mxu0
        %329 = vdwg.mxu0
        %330 = vmatprep.subr.mxu0 0.0
        %v331 = vand.u32 %v147, 4294901760
        %v332 = vsub.f32 %v147, %v331
        %333 = vmatpush1.msra.mxu0 %v332
        %334 = vmatprep.subr.mxu0 0.0
        %v335 = vand.u32 %v148, 4294901760
        %v336 = vsub.f32 %v148, %v335
        %337 = vmatpush1.msra.mxu0 %v336
        %338 = vmatprep.subr.mxu0 0.0
        %339 = vmatpush1.msra.mxu0 0.0
        %340 = vmatprep.subr.mxu0 0.0
        %341 = vmatpush1.msra.mxu0 0.0
        %342 = vmatprep.subr.mxu0 0.0
        %343 = vmatpush1.msra.mxu0 0.0
        %344 = vmatprep.subr.mxu0 0.0
        %345 = vmatpush1.msra.mxu0 0.0
        %346 = vmatprep.subr.mxu0 0.0
        %347 = vmatpush1.msra.mxu0 0.0
        %348 = vmatprep.subr.mxu0 0.0
        %349 = vmatpush1.msra.mxu0 0.0
        %350 = vmatprep.subr.mxu0 0.0
        %351 = vmatpush1.msra.mxu0 0.0
        %352 = vmatprep.subr.mxu0 0.0
        %353 = vmatpush1.msra.mxu0 0.0
        %354 = vmatprep.subr.mxu0 0.0
        %355 = vmatpush1.msra.mxu0 0.0
        %356 = vmatprep.subr.mxu0 0.0
        %357 = vmatpush1.msra.mxu0 0.0
        %358 = vmatprep.subr.mxu0 0.0
        %359 = vmatpush1.msra.mxu0 0.0
        %360 = vmatprep.subr.mxu0 0.0
        %361 = vmatpush1.msra.mxu0 0.0
        %362 = vmatprep.subr.mxu0 0.0
        %363 = vmatpush1.msra.mxu0 0.0
        %364 = vmatprep.subr.mxu0 0.0
        %365 = vmatpush1.msra.mxu0 0.0
        %366 = vmatprep.subr.mxu0 0.0
        %367 = vmatpush1.msra.mxu0 0.0
        %368 = vmatprep.subr.mxu0 0.0
        %369 = vmatpush1.msra.mxu0 0.0
        %370 = vmatprep.subr.mxu0 0.0
        %371 = vmatpush1.msra.mxu0 0.0
        %372 = vmatprep.subr.mxu0 0.0
        %373 = vmatpush1.msra.mxu0 0.0
        %374 = vmatprep.subr.mxu0 0.0
        %375 = vmatpush1.msra.mxu0 0.0
        %376 = vmatprep.subr.mxu0 0.0
        %377 = vmatpush1.msra.mxu0 0.0
        %378 = vmatprep.subr.mxu0 0.0
        %379 = vmatpush1.msra.mxu0 0.0
        %380 = vmatprep.subr.mxu0 0.0
        %381 = vmatpush1.msra.mxu0 0.0
        %382 = vmatprep.subr.mxu0 0.0
        %383 = vmatpush1.msra.mxu0 0.0
        %384 = vmatprep.subr.mxu0 0.0
        %385 = vmatpush1.msra.mxu0 0.0
        %386 = vmatprep.subr.mxu0 0.0
        %387 = vmatpush1.msra.mxu0 0.0
        %388 = vmatprep.subr.mxu0 0.0
        %389 = vmatpush1.msra.mxu0 0.0
        %390 = vmatprep.subr.mxu0 0.0
        %391 = vmatpush1.msra.mxu0 0.0
        %392 = vmatprep.subr.mxu0 0.0
        %393 = vmatpush1.msra.mxu0 0.0
        %394 = vmatprep.subr.mxu0 0.0
        %395 = vmatpush1.msra.mxu0 0.0
        %396 = vmatprep.subr.mxu0 0.0
        %397 = vmatpush1.msra.mxu0 0.0
        %398 = vmatprep.mubr.f32.mxu0 0.0
        %v399 = vand.u32 %v151, 4294901760
        %v400 = vsub.f32 %v151, %v399
        %401 = vmatmul.mubr.f32.gmra.mrb[0].mxu0 %v400
        %v402 = vpop.f32.mrb[0].mxu0
        %v403 = vadd.f32 %v321, %v402
        %v404 = vpop.f32.mrb[0].mxu0
        %405 = vmatprep.mubr.f32.mxu0 0.0
        %v406 = vand.u32 %v154, 4294901760
        %v407 = vsub.f32 %v154, %v406
        %408 = vmatmul.mubr.f32.gmra.mrb[0].mxu0 %v407
        %v409 = vpop.f32.mrb[0].mxu0
        %v410 = vadd.f32 %v327, %v409
        %v411 = vpop.f32.mrb[0].mxu0
        %412 = vdwg.mxu0
        %413 = vmatprep.subr.mxu0 0.0
        %v414 = vand.u32 %v147, 4294901760
        %415 = vmatpush1.msra.mxu0 %v414
        %416 = vmatprep.subr.mxu0 0.0
        %v417 = vand.u32 %v148, 4294901760
        %418 = vmatpush1.msra.mxu0 %v417
        %419 = vmatprep.subr.mxu0 0.0
        %420 = vmatpush1.msra.mxu0 0.0
        %421 = vmatprep.subr.mxu0 0.0
        %422 = vmatpush1.msra.mxu0 0.0
        %423 = vmatprep.subr.mxu0 0.0
        %424 = vmatpush1.msra.mxu0 0.0
        %425 = vmatprep.subr.mxu0 0.0
        %426 = vmatpush1.msra.mxu0 0.0
        %427 = vmatprep.subr.mxu0 0.0
        %428 = vmatpush1.msra.mxu0 0.0
        %429 = vmatprep.subr.mxu0 0.0
        %430 = vmatpush1.msra.mxu0 0.0
        %431 = vmatprep.subr.mxu0 0.0
        %432 = vmatpush1.msra.mxu0 0.0
        %433 = vmatprep.subr.mxu0 0.0
        %434 = vmatpush1.msra.mxu0 0.0
        %435 = vmatprep.subr.mxu0 0.0
        %436 = vmatpush1.msra.mxu0 0.0
        %437 = vmatprep.subr.mxu0 0.0
        %438 = vmatpush1.msra.mxu0 0.0
        %439 = vmatprep.subr.mxu0 0.0
        %440 = vmatpush1.msra.mxu0 0.0
        %441 = vmatprep.subr.mxu0 0.0
        %442 = vmatpush1.msra.mxu0 0.0
        %443 = vmatprep.subr.mxu0 0.0
        %444 = vmatpush1.msra.mxu0 0.0
        %445 = vmatprep.subr.mxu0 0.0
        %446 = vmatpush1.msra.mxu0 0.0
        %447 = vmatprep.subr.mxu0 0.0
        %448 = vmatpush1.msra.mxu0 0.0
        %449 = vmatprep.subr.mxu0 0.0
        %450 = vmatpush1.msra.mxu0 0.0
        %451 = vmatprep.subr.mxu0 0.0
        %452 = vmatpush1.msra.mxu0 0.0
        %453 = vmatprep.subr.mxu0 0.0
        %454 = vmatpush1.msra.mxu0 0.0
        %455 = vmatprep.subr.mxu0 0.0
        %456 = vmatpush1.msra.mxu0 0.0
        %457 = vmatprep.subr.mxu0 0.0
        %458 = vmatpush1.msra.mxu0 0.0
        %459 = vmatprep.subr.mxu0 0.0
        %460 = vmatpush1.msra.mxu0 0.0
        %461 = vmatprep.subr.mxu0 0.0
        %462 = vmatpush1.msra.mxu0 0.0
        %463 = vmatprep.subr.mxu0 0.0
        %464 = vmatpush1.msra.mxu0 0.0
        %465 = vmatprep.subr.mxu0 0.0
        %466 = vmatpush1.msra.mxu0 0.0
        %467 = vmatprep.subr.mxu0 0.0
        %468 = vmatpush1.msra.mxu0 0.0
        %469 = vmatprep.subr.mxu0 0.0
        %470 = vmatpush1.msra.mxu0 0.0
        %471 = vmatprep.subr.mxu0 0.0
        %472 = vmatpush1.msra.mxu0 0.0
        %473 = vmatprep.subr.mxu0 0.0
        %474 = vmatpush1.msra.mxu0 0.0
        %475 = vmatprep.subr.mxu0 0.0
        %476 = vmatpush1.msra.mxu0 0.0
        %477 = vmatprep.subr.mxu0 0.0
        %478 = vmatpush1.msra.mxu0 0.0
        %479 = vmatprep.mubr.f32.mxu0 0.0
        %v480 = vand.u32 %v151, 4294901760
        %v481 = vsub.f32 %v151, %v480
        %v482 = vand.u32 %v481, 4294901760
        %483 = vmatmul.mubr.f32.gmra.mrb[0].mxu0 %v482
        %v484 = vpop.f32.mrb[0].mxu0
        %v485 = vadd.f32 %v403, %v484
        %v486 = vpop.f32.mrb[0].mxu0
        %487 = vmatprep.mubr.f32.mxu0 0.0
        %v488 = vand.u32 %v154, 4294901760
        %v489 = vsub.f32 %v154, %v488
        %v490 = vand.u32 %v489, 4294901760
        %491 = vmatmul.mubr.f32.gmra.mrb[0].mxu0 %v490
        %v492 = vpop.f32.mrb[0].mxu0
        %v493 = vadd.f32 %v410, %v492
        %v494 = vpop.f32.mrb[0].mxu0
        %495 = vdwg.mxu0
        %496 = vmatprep.subr.mxu0 0.0
        %v497 = vand.u32 %v147, 4294901760
        %v498 = vsub.f32 %v147, %v497
        %v499 = vand.u32 %v498, 4294901760
        %500 = vmatpush1.msra.mxu0 %v499
        %501 = vmatprep.subr.mxu0 0.0
        %v502 = vand.u32 %v148, 4294901760
        %v503 = vsub.f32 %v148, %v502
        %v504 = vand.u32 %v503, 4294901760
        %505 = vmatpush1.msra.mxu0 %v504
        %506 = vmatprep.subr.mxu0 0.0
        %507 = vmatpush1.msra.mxu0 0.0
        %508 = vmatprep.subr.mxu0 0.0
        %509 = vmatpush1.msra.mxu0 0.0
        %510 = vmatprep.subr.mxu0 0.0
        %511 = vmatpush1.msra.mxu0 0.0
        %512 = vmatprep.subr.mxu0 0.0
        %513 = vmatpush1.msra.mxu0 0.0
        %514 = vmatprep.subr.mxu0 0.0
        %515 = vmatpush1.msra.mxu0 0.0
        %516 = vmatprep.subr.mxu0 0.0
        %517 = vmatpush1.msra.mxu0 0.0
        %518 = vmatprep.subr.mxu0 0.0
        %519 = vmatpush1.msra.mxu0 0.0
        %520 = vmatprep.subr.mxu0 0.0
        %521 = vmatpush1.msra.mxu0 0.0
        %522 = vmatprep.subr.mxu0 0.0
        %523 = vmatpush1.msra.mxu0 0.0
        %524 = vmatprep.subr.mxu0 0.0
        %525 = vmatpush1.msra.mxu0 0.0
        %526 = vmatprep.subr.mxu0 0.0
        %527 = vmatpush1.msra.mxu0 0.0
        %528 = vmatprep.subr.mxu0 0.0
        %529 = vmatpush1.msra.mxu0 0.0
        %530 = vmatprep.subr.mxu0 0.0
        %531 = vmatpush1.msra.mxu0 0.0
        %532 = vmatprep.subr.mxu0 0.0
        %533 = vmatpush1.msra.mxu0 0.0
        %534 = vmatprep.subr.mxu0 0.0
        %535 = vmatpush1.msra.mxu0 0.0
        %536 = vmatprep.subr.mxu0 0.0
        %537 = vmatpush1.msra.mxu0 0.0
        %538 = vmatprep.subr.mxu0 0.0
        %539 = vmatpush1.msra.mxu0 0.0
        %540 = vmatprep.subr.mxu0 0.0
        %541 = vmatpush1.msra.mxu0 0.0
        %542 = vmatprep.subr.mxu0 0.0
        %543 = vmatpush1.msra.mxu0 0.0
        %544 = vmatprep.subr.mxu0 0.0
        %545 = vmatpush1.msra.mxu0 0.0
        %546 = vmatprep.subr.mxu0 0.0
        %547 = vmatpush1.msra.mxu0 0.0
        %548 = vmatprep.subr.mxu0 0.0
        %549 = vmatpush1.msra.mxu0 0.0
        %550 = vmatprep.subr.mxu0 0.0
        %551 = vmatpush1.msra.mxu0 0.0
        %552 = vmatprep.subr.mxu0 0.0
        %553 = vmatpush1.msra.mxu0 0.0
        %554 = vmatprep.subr.mxu0 0.0
        %555 = vmatpush1.msra.mxu0 0.0
        %556 = vmatprep.subr.mxu0 0.0
        %557 = vmatpush1.msra.mxu0 0.0
        %558 = vmatprep.subr.mxu0 0.0
        %559 = vmatpush1.msra.mxu0 0.0
        %560 = vmatprep.subr.mxu0 0.0
        %561 = vmatpush1.msra.mxu0 0.0
        %562 = vmatprep.subr.mxu0 0.0
        %563 = vmatpush1.msra.mxu0 0.0
        %564 = vmatprep.subr.mxu0 0.0
        %565 = vmatpush1.msra.mxu0 0.0
        %566 = vmatprep.mubr.f32.mxu0 0.0
        %v567 = vand.u32 %v151, 4294901760
        %568 = vmatmul.mubr.f32.gmra.mrb[0].mxu0 %v567
        %v569 = vpop.f32.mrb[0].mxu0
        %v570 = vadd.f32 %v485, %v569
        %v571 = vpop.f32.mrb[0].mxu0
        %572 = vmatprep.mubr.f32.mxu0 0.0
        %v573 = vand.u32 %v154, 4294901760
        %574 = vmatmul.mubr.f32.gmra.mrb[0].mxu0 %v573
        %v575 = vpop.f32.mrb[0].mxu0
        %v576 = vadd.f32 %v493, %v575
        %v577 = vpop.f32.mrb[0].mxu0
        %578 = vdwg.mxu0
        %579 = vmatprep.subr.mxu0 0.0
        %v580 = vand.u32 %v147, 4294901760
        %581 = vmatpush1.msra.mxu0 %v580
        %582 = vmatprep.subr.mxu0 0.0
        %v583 = vand.u32 %v148, 4294901760
        %584 = vmatpush1.msra.mxu0 %v583
        %585 = vmatprep.subr.mxu0 0.0
        %586 = vmatpush1.msra.mxu0 0.0
        %587 = vmatprep.subr.mxu0 0.0
        %588 = vmatpush1.msra.mxu0 0.0
        %589 = vmatprep.subr.mxu0 0.0
        %590 = vmatpush1.msra.mxu0 0.0
        %591 = vmatprep.subr.mxu0 0.0
        %592 = vmatpush1.msra.mxu0 0.0
        %593 = vmatprep.subr.mxu0 0.0
        %594 = vmatpush1.msra.mxu0 0.0
        %595 = vmatprep.subr.mxu0 0.0
        %596 = vmatpush1.msra.mxu0 0.0
        %597 = vmatprep.subr.mxu0 0.0
        %598 = vmatpush1.msra.mxu0 0.0
        %599 = vmatprep.subr.mxu0 0.0
        %600 = vmatpush1.msra.mxu0 0.0
        %601 = vmatprep.subr.mxu0 0.0
        %602 = vmatpush1.msra.mxu0 0.0
        %603 = vmatprep.subr.mxu0 0.0
        %604 = vmatpush1.msra.mxu0 0.0
        %605 = vmatprep.subr.mxu0 0.0
        %606 = vmatpush1.msra.mxu0 0.0
        %607 = vmatprep.subr.mxu0 0.0
        %608 = vmatpush1.msra.mxu0 0.0
        %609 = vmatprep.subr.mxu0 0.0
        %610 = vmatpush1.msra.mxu0 0.0
        %611 = vmatprep.subr.mxu0 0.0
        %612 = vmatpush1.msra.mxu0 0.0
        %613 = vmatprep.subr.mxu0 0.0
        %614 = vmatpush1.msra.mxu0 0.0
        %615 = vmatprep.subr.mxu0 0.0
        %616 = vmatpush1.msra.mxu0 0.0
        %617 = vmatprep.subr.mxu0 0.0
        %618 = vmatpush1.msra.mxu0 0.0
        %619 = vmatprep.subr.mxu0 0.0
        %620 = vmatpush1.msra.mxu0 0.0
        %621 = vmatprep.subr.mxu0 0.0
        %622 = vmatpush1.msra.mxu0 0.0
        %623 = vmatprep.subr.mxu0 0.0
        %624 = vmatpush1.msra.mxu0 0.0
        %625 = vmatprep.subr.mxu0 0.0
        %626 = vmatpush1.msra.mxu0 0.0
        %627 = vmatprep.subr.mxu0 0.0
        %628 = vmatpush1.msra.mxu0 0.0
        %629 = vmatprep.subr.mxu0 0.0
        %630 = vmatpush1.msra.mxu0 0.0
        %631 = vmatprep.subr.mxu0 0.0
        %632 = vmatpush1.msra.mxu0 0.0
        %633 = vmatprep.subr.mxu0 0.0
        %634 = vmatpush1.msra.mxu0 0.0
        %635 = vmatprep.subr.mxu0 0.0
        %636 = vmatpush1.msra.mxu0 0.0
        %637 = vmatprep.subr.mxu0 0.0
        %638 = vmatpush1.msra.mxu0 0.0
        %639 = vmatprep.subr.mxu0 0.0
        %640 = vmatpush1.msra.mxu0 0.0
        %641 = vmatprep.subr.mxu0 0.0
        %642 = vmatpush1.msra.mxu0 0.0
        %643 = vmatprep.subr.mxu0 0.0
        %644 = vmatpush1.msra.mxu0 0.0
        %645 = vmatprep.mubr.f32.mxu0 0.0
        %v646 = vand.u32 %v151, 4294901760
        %647 = vmatmul.mubr.f32.gmra.mrb[0].mxu0 %v646
        %v648 = vpop.f32.mrb[0].mxu0
        %v649 = vadd.f32 %v570, %v648
        %v650 = vpop.f32.mrb[0].mxu0
        %651 = vmatprep.mubr.f32.mxu0 0.0
        %v652 = vand.u32 %v154, 4294901760
        %653 = vmatmul.mubr.f32.gmra.mrb[0].mxu0 %v652
        %v654 = vpop.f32.mrb[0].mxu0
        %v655 = vadd.f32 %v576, %v654
        %v656 = vpop.f32.mrb[0].mxu0
        %657 = vdwg.mxu0
        %658 = vst [vmem:[%s137] sm:$0xff] %v649
        %659 = vst [vmem:[%s137 + $0x8] sm:$0xff] %v655
        %s660 = sand.u32 %s71, 1
        %s661 = scalar_lea.sflag [#allocation3], %s660
        %s662 = sand.u32 %s71, 1
        %s663 = smul.addr %s662, 16
        %s664 = scalar_lea.vmem [#allocation2], %s663
        // Predicated region
        $region29: #{tpu_custom_call.1} parent=27 // pred_check
          %p665 = pneg %p81
        $region30: #{tpu_custom_call.1} parent=27 // pred_check_branch
          %667 = sbr.rel (%p665) target = $region32
        $region31: #{tpu_custom_call.1} parent=27 // pred_region
          %s668 = smul.u32 2, %s16
          %s670 = ssub.s32 256, 256
          %671 = vsyncadd %s661, %s670
          %s672 = smul.addr %s668, 128
          %s673 = scalar_lea.hbm %s2, %s672
          %s674 = sshll.u32 %s664, 4
          %s675 = int_to_ptr.vmem [resolvable:$true] %s674
          %680 = dma.vmem_to_hbm [thread:$0]  %s675, 256, %s673, %s661, 128, 128, 8
        $region32: #{tpu_custom_call.1} parent=27 // pred_fallthru
          _
      $region28: #{tpu_custom_call.1} parent=5 // pred_fallthru
        _
      %p681 = scmp.le.s32.totalorder 2, %s11
      // Predicated region
      $region33: #{tpu_custom_call.1} parent=5 // pred_check
        %p682 = pneg %p681
      $region34: #{tpu_custom_call.1} parent=5 // pred_check_branch
        %684 = sbr.rel (%p682) target = $region36
      $region35: #{tpu_custom_call.1} parent=5 // pred_region
        %s685 = ssub.s32 %s11, 2
        // Predicated region
        $region37: #{tpu_custom_call.1} parent=35 // pred_check
          %p686 = pneg %p87
        $region38: #{tpu_custom_call.1} parent=35 // pred_check_branch
          %688 = sbr.rel (%p686) target = $region40
        $region39: #{tpu_custom_call.1} parent=35 // pred_region
          %s689 = sand.u32 %s72, 1
          %s690 = scalar_lea.sflag [#allocation3], %s689
          %s691 = sand.u32 %s72, 1
          %s692 = smul.addr %s691, 16
          %s693 = scalar_lea.vmem [#allocation2], %s692
          %694 = dma.done %s690, 256
        $region40: #{tpu_custom_call.1} parent=35 // pred_fallthru
          _
      $region36: #{tpu_custom_call.1} parent=5 // pred_fallthru
        _
    $region6: #{tpu_custom_call.1} parent=1 // loop_footer
      %s15 = sadd.s32 1, %s11
    $region7: #{tpu_custom_call.1} parent=1 // loop_footer_branch
      %10 = sbr.rel target = $region3
    $region8: #{tpu_custom_call.1} parent=1 // loop_exit
      _
    %695 = vsyncpa [#allocation3], 1
    %s696 = scalar_lea.sflag [#allocation3], 1
    %697 = vsyncpa %s696, 1

</llo_original>
